<compile_context>
chip_gen: v5e
topology: v5e:2x2
jax: 0.10.0
libtpu: 0.0.40
codegen_flags: <defaults>
</compile_context>

<pallas_src>
import functools

import jax
import jax.numpy as jnp
from jax.experimental import pallas as pl
from jax.experimental.pallas import tpu as pltpu


_LANE = 128
_SUBLANE = 8
# Double-buffered working-set target / requested scoped-VMEM limit.  Chosen to fit
# v7x's 64 MiB physical VMEM with pipelining headroom (v5e/v6e have 128 MiB).
_VMEM_BUDGET = 36 * 1024 * 1024
_VMEM_LIMIT = 48 * 1024 * 1024


def _round_up(v: int, m: int) -> int:
    return ((v + m - 1) // m) * m


def _largest_divisor_tile(total: int, cap: int, quantum: int) -> int:
    """Largest multiple of `quantum` that divides `total` and is <= cap.

    `total` must be a multiple of `quantum`, so `quantum` is always a valid fallback.
    """
    best = quantum
    for cand in range(quantum, min(cap, total) + 1, quantum):
        if total % cand == 0:
            best = cand
    return best


# -----------------------------------------------------------------------------
# Kernels.  The weight arrives pre-transposed to (K, N) layout, so the RHS
# contraction dim sits on sublanes -> plain MXU matmul, no per-step XLU transpose.
# Bias is added once in f32 in the epilogue, then ReLU, then cast + store.
# -----------------------------------------------------------------------------


def _linear_relu_single_k_kernel(x_ref, w_ref, b_ref, o_ref):
    """K fits in VMEM: one MXU pass per (tm, tn) output tile, no accumulator."""
    acc = jnp.dot(x_ref[...], w_ref[...], preferred_element_type=jnp.float32)
    o_ref[...] = jnp.maximum(acc + b_ref[...], 0.0).astype(o_ref.dtype)


def _linear_relu_multi_k_kernel(x_ref, w_ref, b_ref, o_ref, acc_ref):
    """Large K: reduction over grid axis 2 with an f32 VMEM accumulator."""
    k = pl.program_id(2)

    @pl.when(k == 0)
    def _():
        acc_ref[...] = jnp.zeros_like(acc_ref)

    acc_ref[...] += jnp.dot(x_ref[...], w_ref[...],
                            preferred_element_type=jnp.float32)

    @pl.when(k == pl.num_programs(2) - 1)
    def _():
        o_ref[...] = jnp.maximum(acc_ref[...] + b_ref[...], 0.0).astype(o_ref.dtype)


def _forward_impl(x, w_kn, b_row, *, n_valid, compute_dtype):
    """y = ReLU(x @ W^T + b) with W supplied pre-transposed/padded as (K_pad, N_pad)."""
    M, K = x.shape
    out_dtype = x.dtype
    K_pad, N_pad = w_kn.shape
    assert K <= K_pad
    in_bytes = jnp.dtype(compute_dtype).itemsize
    out_bytes = jnp.dtype(out_dtype).itemsize

    # ---- tile selection (static under jit) ----
    tm = min(512, _round_up(M, _SUBLANE))
    M_pad = _round_up(M, tm)
    mg = M_pad // tm

    tn = _largest_divisor_tile(N_pad, 1024, _LANE)
    # v7x megacore: keep >= 2 parallel (i, j) tiles when the M grid collapses to 1.
    if mg == 1 and N_pad // tn == 1 and N_pad >= 2 * _LANE:
        tn = _largest_divisor_tile(N_pad, N_pad // 2, _LANE)

    # Double-buffered working set if we collapse the K axis (x + w + out + bias).
    ws_single = (2 * (tm * K_pad + K_pad * tn) * in_bytes
                 + 2 * tm * tn * out_bytes + 2 * tn * 4)
    single_k = ws_single <= _VMEM_BUDGET

    if single_k:
        tk = K_pad
    else:
        # K-tiled accumulator fallback with modest, known-fitting tiles.
        tm = min(tm, 256)
        M_pad = _round_up(M, tm)
        mg = M_pad // tm
        tn = _largest_divisor_tile(N_pad, 512, _LANE)
        tk = _largest_divisor_tile(K_pad, 1024, _LANE)

    ng = N_pad // tn
    kg = K_pad // tk

    # ---- pad & cast activations (cheap; the weight was prepared once up front) ----
    if M_pad != M or K_pad != K:
        x = jnp.pad(x, ((0, M_pad - M), (0, K_pad - K)))
    x_p = x.astype(compute_dtype)

    flops = 2 * M_pad * N_pad * K_pad
    bytes_accessed = (ng * M_pad * K_pad * in_bytes      # x (re-)reads
                      + mg * K_pad * N_pad * in_bytes    # weight (re-)reads
                      + M_pad * N_pad * out_bytes        # output store
                      + N_pad * 4)                       # bias
    cost = pl.CostEstimate(flops=flops, transcendentals=0,
                           bytes_accessed=bytes_accessed)

    if single_k:
        out_p = pl.pallas_call(
            _linear_relu_single_k_kernel,
            out_shape=jax.ShapeDtypeStruct((M_pad, N_pad), out_dtype),
            grid_spec=pltpu.PrefetchScalarGridSpec(
                num_scalar_prefetch=0,
                grid=(mg, ng),
                in_specs=[
                    pl.BlockSpec((tm, K_pad), lambda i, j: (i, 0)),  # x: once per i
                    pl.BlockSpec((K_pad, tn), lambda i, j: (0, j)),  # W in (K, N)
                    pl.BlockSpec((1, tn), lambda i, j: (0, j)),      # bias slab
                ],
                out_specs=pl.BlockSpec((tm, tn), lambda i, j: (i, j)),
            ),
            compiler_params=pltpu.CompilerParams(
                dimension_semantics=("parallel", "parallel"),
                vmem_limit_bytes=_VMEM_LIMIT,
            ),
            cost_estimate=cost,
        )(x_p, w_kn, b_row)
    else:
        out_p = pl.pallas_call(
            _linear_relu_multi_k_kernel,
            out_shape=jax.ShapeDtypeStruct((M_pad, N_pad), out_dtype),
            grid_spec=pltpu.PrefetchScalarGridSpec(
                num_scalar_prefetch=0,
                grid=(mg, ng, kg),
                in_specs=[
                    pl.BlockSpec((tm, tk), lambda i, j, k: (i, k)),  # x tile
                    pl.BlockSpec((tk, tn), lambda i, j, k: (k, j)),  # W (K, N) tile
                    pl.BlockSpec((1, tn), lambda i, j, k: (0, j)),   # bias slab
                ],
                out_specs=pl.BlockSpec((tm, tn), lambda i, j, k: (i, j)),
                scratch_shapes=[pltpu.VMEM((tm, tn), jnp.float32)],
            ),
            compiler_params=pltpu.CompilerParams(
                dimension_semantics=("parallel", "parallel", "arbitrary"),
                vmem_limit_bytes=_VMEM_LIMIT,
            ),
            cost_estimate=cost,
        )(x_p, w_kn, b_row)

    return out_p[:M, :n_valid]


def make_classifier(weight, bias, *, compute_dtype=jnp.bfloat16):
    """Build a jitted forward(x) == ReLU(x @ weight.T + bias).

    weight: (out_features, in_features)  -- PyTorch nn.Linear layout
    bias:   (out_features,)

    The weight is padded to lane quanta, transposed to (K_pad, N_pad) and cast to the
    MXU compute dtype ONCE here (cached outside the per-call path), so each forward
    call streams those HBM bytes exactly as stored, with no per-call transform.
    """
    N, K = weight.shape
    assert bias.shape == (N,), "bias must match out_features"
    K_pad = _round_up(K, _LANE)
    N_pad = _round_up(N, _LANE)

    w_kn = jnp.pad(weight, ((0, N_pad - N), (0, K_pad - K))).T.astype(compute_dtype)
    b_row = jnp.pad(bias, (0, N_pad - N)).astype(jnp.float32).reshape(1, N_pad)

    fwd = jax.jit(functools.partial(_forward_impl, n_valid=N,
                                    compute_dtype=compute_dtype))

    def forward(x):
        return fwd(x, w_kn, b_row)

    return forward


if __name__ == "__main__":
    # Small shapes consistent with the module's forward: x is (batch, in_features).
    batch, in_features, out_features = 2, 32, 16

    key = jax.random.PRNGKey(0)
    kx, kw, kb = jax.random.split(key, 3)

    x = jax.random.normal(kx, (batch, in_features), dtype=jnp.float32)
    # nn.Linear parameter shapes: W (out, in), b (out,).
    weight = jax.random.normal(kw, (out_features, in_features), dtype=jnp.float32) * 0.1
    bias = jax.random.normal(kb, (out_features,), dtype=jnp.float32) * 0.1

    # 1) f32 operand path: exact check against the PyTorch-equivalent reference.
    fwd_f32 = make_classifier(weight, bias, compute_dtype=jnp.float32)
    out_f32 = jax.block_until_ready(fwd_f32(x))
    ref_f32 = jnp.maximum(x @ weight.T + bias, 0.0)
    assert out_f32.shape == (batch, out_features)
    assert jnp.allclose(out_f32, ref_f32, atol=1e-5, rtol=1e-5)

    # 2) Default path: bf16 operands streamed from HBM, f32 MXU accumulation.
    fwd_bf16 = make_classifier(weight, bias)
    out_bf16 = jax.block_until_ready(fwd_bf16(x))
    ref_bf16 = jnp.maximum(
        jnp.dot(x.astype(jnp.bfloat16), weight.astype(jnp.bfloat16).T,
                preferred_element_type=jnp.float32) + bias, 0.0)
    assert out_bf16.shape == (batch, out_features)
    assert jnp.allclose(out_bf16, ref_bf16, atol=1e-4, rtol=1e-4)
    assert jnp.allclose(out_bf16, ref_f32, atol=2e-2, rtol=2e-2)

    # 3) Non-lane-aligned shapes (exercises padding + slice-back).
    b2, k2, n2 = 5, 70, 33
    x2 = jax.random.normal(jax.random.PRNGKey(1), (b2, k2), dtype=jnp.float32)
    w2 = jax.random.normal(jax.random.PRNGKey(2), (n2, k2), dtype=jnp.float32) * 0.1
    bb2 = jax.random.normal(jax.random.PRNGKey(3), (n2,), dtype=jnp.float32) * 0.1
    out2 = jax.block_until_ready(make_classifier(w2, bb2)(x2))
    ref2 = jnp.maximum(
        jnp.dot(x2.astype(jnp.bfloat16), w2.astype(jnp.bfloat16).T,
                preferred_element_type=jnp.float32) + bb2, 0.0)
    assert out2.shape == (b2, n2)
    assert jnp.allclose(out2, ref2, atol=1e-3, rtol=1e-3)

    print("KERNEL_OK")
</pallas_src>

<mosaic_0001>
module attributes {stable_mosaic.version = 11 : i64} {
  func.func @_linear_relu_single_k_kernel(%arg0: i32, %arg1: i32, %arg2: memref<8x128xf32, #tpu.memory_space<vmem>>, %arg3: memref<128x128xf32, #tpu.memory_space<vmem>>, %arg4: memref<1x128xf32, #tpu.memory_space<vmem>>, %arg5: memref<8x128xf32, #tpu.memory_space<vmem>>) attributes {dimension_semantics = [#tpu.dimension_semantics<parallel>, #tpu.dimension_semantics<parallel>], iteration_bounds = array<i64: 1, 1>, scalar_prefetch = 0 : i64, scratch_operands = 0 : i64, tpu.core_type = #tpu.core_type<tc>, window_params = [{transform_indices = @transform_0, window_bounds = array<i64: 8, 128>}, {transform_indices = @transform_1, window_bounds = array<i64: 128, 128>}, {transform_indices = @transform_2, window_bounds = array<i64: 1, 128>}, {transform_indices = @transform_3, window_bounds = array<i64: 8, 128>}]} {
    %c0 = arith.constant 0 : index
    %c0_0 = arith.constant 0 : index
    %0 = vector.load %arg2[%c0, %c0_0] : memref<8x128xf32, #tpu.memory_space<vmem>>, vector<8x128xf32>
    %c0_1 = arith.constant 0 : index
    %c0_2 = arith.constant 0 : index
    %1 = vector.load %arg3[%c0_1, %c0_2] : memref<128x128xf32, #tpu.memory_space<vmem>>, vector<128x128xf32>
    %cst = arith.constant dense<0.000000e+00> : vector<8x128xf32>
    %2 = tpu.matmul %0, %1, %cst {dimension_numbers = #tpu.dot_dimension_numbers<[1], [0], [0], [1], [0, 0, 1, 1], [], []>} : vector<8x128xf32>, vector<128x128xf32>, vector<8x128xf32> -> vector<8x128xf32>
    %c0_3 = arith.constant 0 : index
    %c0_4 = arith.constant 0 : index
    %3 = vector.load %arg4[%c0_3, %c0_4] : memref<1x128xf32, #tpu.memory_space<vmem>>, vector<1x128xf32>
    %4 = vector.broadcast %3 : vector<1x128xf32> to vector<8x128xf32>
    %5 = arith.addf %2, %4 : vector<8x128xf32>
    %cst_5 = arith.constant 0.000000e+00 : f32
    %6 = vector.broadcast %cst_5 : f32 to vector<8x128xf32>
    %7 = arith.maximumf %5, %6 : vector<8x128xf32>
    %c0_6 = arith.constant 0 : index
    %c0_7 = arith.constant 0 : index
    %8 = vector.load %arg5[%c0_6, %c0_7] : memref<8x128xf32, #tpu.memory_space<vmem>>, vector<8x128xf32>
    tpu.vector_store %arg5[%c0_6, %c0_7], %7 {strides = array<i32>} : memref<8x128xf32, #tpu.memory_space<vmem>>, vector<8x128xf32>,
    return
  }
  func.func @transform_0(%arg0: i32, %arg1: i32) -> (i32, i32) {
    %c0_i32 = arith.constant 0 : i32
    %c0_i32_0 = arith.constant 0 : i32
    return %arg0, %c0_i32 : i32, i32
  }
  func.func @transform_1(%arg0: i32, %arg1: i32) -> (i32, i32) {
    %c0_i32 = arith.constant 0 : i32
    %c0_i32_0 = arith.constant 0 : i32
    return %c0_i32, %arg1 : i32, i32
  }
  func.func @transform_2(%arg0: i32, %arg1: i32) -> (i32, i32) {
    %c0_i32 = arith.constant 0 : i32
    %c0_i32_0 = arith.constant 0 : i32
    return %c0_i32, %arg1 : i32, i32
  }
  func.func @transform_3(%arg0: i32, %arg1: i32) -> (i32, i32) {
    %c0_i32 = arith.constant 0 : i32
    return %arg0, %arg1 : i32, i32
  }
}

</mosaic_0001>

<llo_original>
// kernel: _forward_impl.1
$region0: #{_forward_impl.1}
  #allocation0 [shape = 'u32[]', space=smem, size = 0x4, offset = 0x4, fixed_abs, tag = 'smem constant byte address 0x4 - core index']
  #allocation1 [shape = 'u32[72,128]{1,0:T(1,128)}', space=vmem, size = 0x9000, scoped, tag = 'internal scratch']
  %s0 = inlined_call_operand.vmem [shape: f32[8,128], index: 0, kind: input, shape index: {}]
  %s1 = inlined_call_operand.hbm [shape: f32[128,128], index: 1, kind: input, shape index: {}]
  %s2 = inlined_call_operand.vmem [shape: f32[1,128], index: 2, kind: input, shape index: {}]
  %s3 = inlined_call_operand.vmem [shape: f32[8,128], index: 3, kind: output, shape index: {}]
  %s4 = sld [smem:[#allocation0]]
  $region26: #{_forward_impl.1} parent=0
    _
  %s6 = ssub.s32 1, %s4
  %s7 = scalar_select 0, %s6, %s4
  $region1: #{_forward_impl.1} parent=0
    #allocation2 [shape = 'u8[65536]{0}', space=vmem, size = 0x10000, scoped, tag = 'input window, operand 1, single buffered']
    #allocation3 [shape = 's32[1]{0}', space=sflag, size = 0x4, scoped, tag = 'scoped memory for _forward_impl.1']
    %8 = vsyncpa [#allocation3], 0
    // Predicated region
    $region2: #{_forward_impl.1} parent=1 // pred_check
      _
    $region3: #{_forward_impl.1} parent=1 // pred_check_branch
      %10 = sbr.rel (0) target = $region5
    $region4: #{_forward_impl.1} parent=1 // pred_region
      _
    $region5: #{_forward_impl.1} parent=1 // pred_fallthru
      _
    // Predicated region
    $region6: #{_forward_impl.1} parent=1 // pred_check
      _
    $region7: #{_forward_impl.1} parent=1 // pred_check_branch
      %12 = sbr.rel (0) target = $region9
    $region8: #{_forward_impl.1} parent=1 // pred_region
      %14 = vsyncadd [#allocation3], 0
      %s15 = sshll.u32 %s1, 4
      %s16 = int_to_ptr.hbm [resolvable:$true] %s15
      %s17 = sshll.u32 [#allocation2], 4
      %s18 = int_to_ptr.vmem [resolvable:$true] %s17
      %23 = dma.hbm_to_vmem [thread:$0]  %s16, 2048, %s18, [#allocation3], 128, 128, 8
    $region9: #{_forward_impl.1} parent=1 // pred_fallthru
      _
    // Predicated region
    $region10: #{_forward_impl.1} parent=1 // pred_check
      _
    $region11: #{_forward_impl.1} parent=1 // pred_check_branch
      %25 = sbr.rel (0) target = $region13
    $region12: #{_forward_impl.1} parent=1 // pred_region
      _
    $region13: #{_forward_impl.1} parent=1 // pred_fallthru
      _
    // Predicated region
    $region14: #{_forward_impl.1} parent=1 // pred_check
      _
    $region15: #{_forward_impl.1} parent=1 // pred_check_branch
      %27 = sbr.rel (0) target = $region17
    $region16: #{_forward_impl.1} parent=1 // pred_region
      %29 = dma.done [#allocation3], 2048
    $region17: #{_forward_impl.1} parent=1 // pred_fallthru
      _
    %v30 = vld [vmem:[%s0] sm:$0xff]
    %v31 = vld [vmem:[#allocation2] sm:$0xff]
    %v32 = vld [vmem:[#allocation2 + $0x8] sm:$0xff]
    %v33 = vld [vmem:[#allocation2 + $0x10] sm:$0xff]
    %v34 = vld [vmem:[#allocation2 + $0x18] sm:$0xff]
    %v35 = vld [vmem:[#allocation2 + $0x20] sm:$0xff]
    %v36 = vld [vmem:[#allocation2 + $0x28] sm:$0xff]
    %v37 = vld [vmem:[#allocation2 + $0x30] sm:$0xff]
    %v38 = vld [vmem:[#allocation2 + $0x38] sm:$0xff]
    %v39 = vld [vmem:[#allocation2 + $0x40] sm:$0xff]
    %v40 = vld [vmem:[#allocation2 + $0x48] sm:$0xff]
    %v41 = vld [vmem:[#allocation2 + $0x50] sm:$0xff]
    %v42 = vld [vmem:[#allocation2 + $0x58] sm:$0xff]
    %v43 = vld [vmem:[#allocation2 + $0x60] sm:$0xff]
    %v44 = vld [vmem:[#allocation2 + $0x68] sm:$0xff]
    %v45 = vld [vmem:[#allocation2 + $0x70] sm:$0xff]
    %v46 = vld [vmem:[#allocation2 + $0x78] sm:$0xff]
    %v47 = vld [vmem:[%s2] sm:$0x1]
    %v49 = vperm.slane %v47, 0
    %51 = vmatpush.msra.mxu0 %v46
    %52 = vmatpush.msra.mxu0 %v45
    %53 = vmatpush.msra.mxu0 %v44
    %54 = vmatpush.msra.mxu0 %v43
    %55 = vmatpush.msra.mxu0 %v42
    %56 = vmatpush.msra.mxu0 %v41
    %57 = vmatpush.msra.mxu0 %v40
    %58 = vmatpush.msra.mxu0 %v39
    %59 = vmatpush.msra.mxu0 %v38
    %60 = vmatpush.msra.mxu0 %v37
    %61 = vmatpush.msra.mxu0 %v36
    %62 = vmatpush.msra.mxu0 %v35
    %63 = vmatpush.msra.mxu0 %v34
    %64 = vmatpush.msra.mxu0 %v33
    %65 = vmatpush.msra.mxu0 %v32
    %66 = vmatpush.msra.mxu0 %v31
    %67 = vmatmul.f32.gmra.mxu0 %v30
    %v68 = vpop.f32.mrf.mxu0
    %v69 = vadd.f32 %v49, %v68
    %70 = vdwg.mxu0
    %v71 = vmax.f32 %v69, 0.0
    %72 = vst [vmem:[%s3] sm:$0xff] %v71
    // Predicated region
    $region18: #{_forward_impl.1} parent=1 // pred_check
      _
    $region19: #{_forward_impl.1} parent=1 // pred_check_branch
      %74 = sbr.rel (0) target = $region21
    $region20: #{_forward_impl.1} parent=1 // pred_region
      _
    $region21: #{_forward_impl.1} parent=1 // pred_fallthru
      _
    // Predicated region
    $region22: #{_forward_impl.1} parent=1 // pred_check
      _
    $region23: #{_forward_impl.1} parent=1 // pred_check_branch
      %76 = sbr.rel (0) target = $region25
    $region24: #{_forward_impl.1} parent=1 // pred_region
      _
    $region25: #{_forward_impl.1} parent=1 // pred_fallthru
      _
    %77 = vsyncpa [#allocation3], 1

</llo_original>
